<compile_context>
chip_gen: v6e
topology: v6e:2x2x1
jax: 0.10.0
libtpu: 0.0.40
codegen_flags: <defaults>
</compile_context>

<pallas_src>
import jax
import jax.numpy as jnp
from jax.experimental import pallas as pl
from jax.experimental.pallas import tpu as pltpu


def _round_up(n, m):
    return (n + m - 1) // m * m


def _attn_kernel(x_ref, w_ref, o_ref):
    """One batch tile (Bt sequences) per grid step: fused QKV + softmax + context."""
    bt, seq, d_in = x_ref.shape
    d_out = o_ref.shape[-1]
    scale = 1.0 / float(d_out) ** 0.5

    # Fused pad/cast: x arrives unpadded f32, cast to bf16 in VMEM (no extra
    # HBM pass in the wrapper).
    x = x_ref[...].astype(jnp.bfloat16)            # (Bt, S, d_in)
    w = w_ref[...]                                 # (d_in, 3*d_out) bf16

    # Fused q/k/v projection: ONE wide MXU matmul with M = Bt*S rows,
    # f32 accumulation.  (S is a multiple of the sublane size here, so the
    # reshape is a free relayout.)
    qkv = jnp.dot(x.reshape(bt * seq, d_in), w,
                  preferred_element_type=jnp.float32)      # (Bt*S, 3*d_out) f32
    qkv = qkv.reshape(bt, seq, 3 * d_out)
    q = qkv[..., 0 * d_out:1 * d_out] * scale      # fold 1/sqrt(d_out) into q
    k = qkv[..., 1 * d_out:2 * d_out]
    v = qkv[..., 2 * d_out:3 * d_out]

    # Per-sequence scores = q @ k^T, contracting the last axes (no XLU
    # transpose of k).  Kept in f32: this matmul is tiny (S x S per sequence),
    # so bf16 would only cost accuracy, not buy speed.
    scores = jnp.einsum('bqd,bkd->bqk', q, k,
                        preferred_element_type=jnp.float32)  # (Bt, S, S) f32

    # Numerically stable softmax in f32; normalization via approx reciprocal
    # (EUP slot) + a single multiply instead of a VALU divide.
    scores = scores - jnp.max(scores, axis=-1, keepdims=True)
    e = jnp.exp(scores)
    probs = e * pl.reciprocal(jnp.sum(e, axis=-1, keepdims=True), approx=True)

    # context = probs @ v (f32, tiny).
    ctx = jnp.einsum('bqk,bkd->bqd', probs, v,
                     preferred_element_type=jnp.float32)     # (Bt, S, d_out)
    o_ref[...] = ctx.astype(o_ref.dtype)


def fuse_qkv_weights(w_query, w_key, w_value):
    """Concatenate + bf16-cast the weights ONCE (hoist out of the per-call path)."""
    return jnp.concatenate([w_query, w_key, w_value], axis=1).astype(jnp.bfloat16)


def _pick_batch_tile(B, S):
    """Bt so Bt*S ~ 512 MXU rows (>=256 fills a v6e/v7x pass, >=128 a v5e pass),
    capped by B and by a conservative VMEM budget for the (Bt, S, S) softmax tile."""
    target_rows = 512
    bt = max(1, min(B, target_rows // max(S, 1)))
    # ~4 live f32 (Bt,S,S) temporaries (scores/exp/probs/sum) must stay well
    # under the scoped-VMEM limit (32 MiB default on v6e/v7x).
    while bt > 1 and 4 * bt * S * S * 4 > (8 << 20):
        bt //= 2
    return bt


@jax.jit
def self_attention_fused(x, w_qkv):
    """x: (S, d_in) or (B, S, d_in) f32; w_qkv: (d_in, 3*d_out) bf16 -> (.., S, d_out) f32."""
    squeeze = x.ndim == 2
    if squeeze:
        x = x[None]
    B, S, d_in = x.shape
    d_out = w_qkv.shape[1] // 3

    # Whole-(S,S)-score-tile path only; guard so long sequences fail loudly
    # instead of silently spilling VMEM (threshold ~halves on v7x's 64 MiB VMEM).
    if S > 2048:
        raise NotImplementedError(
            "S too large for the single-tile softmax path; needs a flash-style kernel")

    Bt = _pick_batch_tile(B, S)
    B_pad = _round_up(B, Bt)
    if B_pad != B:
        # Pad the batch remainder with zero sequences (sliced away below);
        # only touches the remainder, the common divisible case is a no-op.
        x = jnp.pad(x, ((0, B_pad - B), (0, 0), (0, 0)))

    out = pl.pallas_call(
        _attn_kernel,
        out_shape=jax.ShapeDtypeStruct((B_pad, S, d_out), jnp.float32),
        grid=(B_pad // Bt,),
        in_specs=[
            # x unpadded: last two block dims equal the full (S, d_in) extents,
            # so the (8,128) divisibility rule does not apply; bf16 cast happens
            # in-kernel.
            pl.BlockSpec((Bt, S, d_in), lambda b: (b, 0, 0)),
            # fused weights: constant index_map -> DMA'd once, kept resident.
            pl.BlockSpec((d_in, 3 * d_out), lambda b: (0, 0)),
        ],
        # Output stored unpadded; no post-kernel slice pass.
        out_specs=pl.BlockSpec((Bt, S, d_out), lambda b: (b, 0, 0)),
        compiler_params=pltpu.CompilerParams(
            dimension_semantics=("parallel",)),   # batch tiles across TCs (v7x)
    )(x, w_qkv)

    if B_pad != B:
        out = out[:B]
    return out[0] if squeeze else out


def self_attention_v1(x, w_query, w_key, w_value):
    """Convenience wrapper matching the module signature (fuses weights per call)."""
    return self_attention_fused(x, fuse_qkv_weights(w_query, w_key, w_value))


def reference(x, wq, wk, wv):
    q = x @ wq
    k = x @ wk
    v = x @ wv
    s = (q @ k.T) * (1.0 / jnp.sqrt(jnp.float32(k.shape[-1])))
    return jax.nn.softmax(s, axis=-1) @ v


if __name__ == "__main__":
    # Shapes consistent with the module: seq=8 tokens, d_in=32, d_out=16.
    S, D_IN, D_OUT = 8, 32, 16

    key = jax.random.PRNGKey(0)
    kx, kq, kk, kv, kb = jax.random.split(key, 5)

    # Embedded tokens ~ N(0, 1); weights ~ U[0, 1) to mirror torch.rand init.
    x = jax.random.normal(kx, (S, D_IN), dtype=jnp.float32)
    w_query = jax.random.uniform(kq, (D_IN, D_OUT), dtype=jnp.float32)
    w_key = jax.random.uniform(kk, (D_IN, D_OUT), dtype=jnp.float32)
    w_value = jax.random.uniform(kv, (D_IN, D_OUT), dtype=jnp.float32)

    # Hoisted fused-weight construction: computed once, reused across calls.
    w_qkv = fuse_qkv_weights(w_query, w_key, w_value)

    # Single sequence (2-D input, like the PyTorch module's forward).
    out = jax.block_until_ready(self_attention_fused(x, w_qkv))
    ref = reference(x, w_query, w_key, w_value)
    assert out.shape == (S, D_OUT)
    # bf16 projection operands + approx reciprocal -> relaxed tolerance.
    tol = 3e-2 * float(jnp.max(jnp.abs(ref)))
    assert float(jnp.max(jnp.abs(out - ref))) < tol, "mismatch vs reference"

    # Batched: 32 sequences in ONE grid step (Bt*S = 256 MXU rows).
    B = 32
    xb = jax.random.normal(kb, (B, S, D_IN), dtype=jnp.float32)
    outb = jax.block_until_ready(self_attention_fused(xb, w_qkv))
    refb = jax.vmap(lambda xi: reference(xi, w_query, w_key, w_value))(xb)
    assert outb.shape == (B, S, D_OUT)
    tolb = 3e-2 * float(jnp.max(jnp.abs(refb)))
    assert float(jnp.max(jnp.abs(outb - refb))) < tolb, "batched mismatch vs reference"

    print("KERNEL_OK")
</pallas_src>

<mosaic_0001>
module attributes {stable_mosaic.version = 11 : i64} {
  func.func @_attn_kernel(%arg0: i32, %arg1: memref<1x8x32xf32, #tpu.memory_space<vmem>>, %arg2: memref<32x48xbf16, #tpu.memory_space<vmem>>, %arg3: memref<1x8x16xf32, #tpu.memory_space<vmem>>) attributes {dimension_semantics = [#tpu.dimension_semantics<parallel>], iteration_bounds = array<i64: 1>, scalar_prefetch = 0 : i64, scratch_operands = 0 : i64, tpu.core_type = #tpu.core_type<tc>, window_params = [{transform_indices = @transform_0, window_bounds = array<i64: 1, 8, 32>}, {pipeline_mode = #tpu.pipeline_mode<synchronous>, transform_indices = @transform_1, window_bounds = array<i64: 32, 48>}, {transform_indices = @transform_2, window_bounds = array<i64: 1, 8, 16>}]} {
    %c0 = arith.constant 0 : index
    %c0_0 = arith.constant 0 : index
    %c0_1 = arith.constant 0 : index
    %0 = vector.load %arg1[%c0, %c0_0, %c0_1] : memref<1x8x32xf32, #tpu.memory_space<vmem>>, vector<1x8x32xf32>
    %1 = arith.truncf %0 : vector<1x8x32xf32> to vector<1x8x32xbf16>
    %c0_2 = arith.constant 0 : index
    %c0_3 = arith.constant 0 : index
    %2 = vector.load %arg2[%c0_2, %c0_3] : memref<32x48xbf16, #tpu.memory_space<vmem>>, vector<32x48xbf16>
    %3 = vector.shape_cast %1 : vector<1x8x32xbf16> to vector<8x32xbf16>
    %cst = arith.constant dense<0.000000e+00> : vector<8x48xf32>
    %4 = tpu.matmul %3, %2, %cst {dimension_numbers = #tpu.dot_dimension_numbers<[1], [0], [0], [1], [0, 0, 1, 1], [], []>} : vector<8x32xbf16>, vector<32x48xbf16>, vector<8x48xf32> -> vector<8x48xf32>
    %5 = vector.shape_cast %4 : vector<8x48xf32> to vector<1x8x48xf32>
    %6 = vector.extract_strided_slice %5 {offsets = [0, 0, 0], sizes = [1, 8, 16], strides = [1, 1, 1]} : vector<1x8x48xf32> to vector<1x8x16xf32>
    %cst_4 = arith.constant 2.500000e-01 : f32
    %7 = vector.broadcast %cst_4 : f32 to vector<1x8x16xf32>
    %8 = arith.mulf %6, %7 : vector<1x8x16xf32>
    %9 = vector.extract_strided_slice %5 {offsets = [0, 0, 16], sizes = [1, 8, 16], strides = [1, 1, 1]} : vector<1x8x48xf32> to vector<1x8x16xf32>
    %10 = vector.extract_strided_slice %5 {offsets = [0, 0, 32], sizes = [1, 8, 16], strides = [1, 1, 1]} : vector<1x8x48xf32> to vector<1x8x16xf32>
    "tpu.trace_start"() <{level = 10 : i32, message = "bqd,bkd->bqk"}> : () -> ()
    %cst_5 = arith.constant dense<0.000000e+00> : vector<1x8x8xf32>
    %11 = tpu.matmul %8, %9, %cst_5 {dimension_numbers = #tpu.dot_dimension_numbers<[2], [2], [1], [1], [0, 0, 0, 1, 1, 1], [0], [0]>} : vector<1x8x16xf32>, vector<1x8x16xf32>, vector<1x8x8xf32> -> vector<1x8x8xf32>
    "tpu.trace_stop"() : () -> ()
    %cst_6 = arith.constant dense<0xFF800000> : vector<1x8xf32>
    %12 = vector.multi_reduction <maximumf>, %11, %cst_6 [2] : vector<1x8x8xf32> to vector<1x8xf32>
    %13 = vector.shape_cast %12 : vector<1x8xf32> to vector<1x8x1xf32>
    %14 = vector.broadcast %13 : vector<1x8x1xf32> to vector<1x8x8xf32>
    %15 = arith.subf %11, %14 : vector<1x8x8xf32>
    %16 = math.exp %15 : vector<1x8x8xf32>
    %cst_7 = arith.constant dense<0.000000e+00> : vector<1x8xf32>
    %17 = vector.multi_reduction <add>, %16, %cst_7 [2] : vector<1x8x8xf32> to vector<1x8xf32>
    %18 = vector.shape_cast %17 : vector<1x8xf32> to vector<1x8x1xf32>
    %19 = tpu.reciprocal %18 {approx = true} : vector<1x8x1xf32> -> vector<1x8x1xf32>
    %20 = vector.broadcast %19 : vector<1x8x1xf32> to vector<1x8x8xf32>
    %21 = arith.mulf %16, %20 : vector<1x8x8xf32>
    "tpu.trace_start"() <{level = 10 : i32, message = "bqk,bkd->bqd"}> : () -> ()
    %cst_8 = arith.constant dense<0.000000e+00> : vector<1x8x16xf32>
    %22 = tpu.matmul %21, %10, %cst_8 {dimension_numbers = #tpu.dot_dimension_numbers<[2], [1], [1], [2], [0, 0, 0, 1, 1, 2], [0], [0]>} : vector<1x8x8xf32>, vector<1x8x16xf32>, vector<1x8x16xf32> -> vector<1x8x16xf32>
    "tpu.trace_stop"() : () -> ()
    %c0_9 = arith.constant 0 : index
    %c0_10 = arith.constant 0 : index
    %c0_11 = arith.constant 0 : index
    %23 = vector.load %arg3[%c0_9, %c0_10, %c0_11] : memref<1x8x16xf32, #tpu.memory_space<vmem>>, vector<1x8x16xf32>
    tpu.vector_store %arg3[%c0_9, %c0_10, %c0_11], %22 {strides = array<i32>} : memref<1x8x16xf32, #tpu.memory_space<vmem>>, vector<1x8x16xf32>,
    return
  }
  func.func @transform_0(%arg0: i32) -> (i32, i32, i32) {
    %c0_i32 = arith.constant 0 : i32
    %c0_i32_0 = arith.constant 0 : i32
    %c0_i32_1 = arith.constant 0 : i32
    return %arg0, %c0_i32, %c0_i32_0 : i32, i32, i32
  }
  func.func @transform_1(%arg0: i32) -> (i32, i32) {
    %c0_i32 = arith.constant 0 : i32
    %c0_i32_0 = arith.constant 0 : i32
    %c0_i32_1 = arith.constant 0 : i32
    return %c0_i32, %c0_i32_0 : i32, i32
  }
  func.func @transform_2(%arg0: i32) -> (i32, i32, i32) {
    %c0_i32 = arith.constant 0 : i32
    %c0_i32_0 = arith.constant 0 : i32
    %c0_i32_1 = arith.constant 0 : i32
    return %arg0, %c0_i32, %c0_i32_0 : i32, i32, i32
  }
}

</mosaic_0001>

<llo_original>
// kernel: self_attention_fused.1
$region0: #{self_attention_fused.1}
  #allocation0 [shape = 'u32[]', space=smem, size = 0x4, offset = 0x4, fixed_abs, tag = 'smem constant byte address 0x4 - core index']
  #allocation1 [shape = 'u32[144,128]{1,0:T(1,128)}', space=vmem, size = 0x12000, scoped, tag = 'internal scratch']
  %s0 = inlined_call_operand.hbm [shape: f32[1,8,32], index: 0, kind: input, shape index: {}]
  %s1 = inlined_call_operand.hbm [shape: bf16[32,48], index: 1, kind: input, shape index: {}]
  %s2 = inlined_call_operand.hbm [shape: f32[1,8,16], index: 2, kind: output, shape index: {}]
  %s3 = sld [smem:[#allocation0]]
  $region26: #{self_attention_fused.1} parent=0
    _
  %s5 = ssub.s32 1, %s3
  %s6 = scalar_select 0, %s5, %s3
  $region1: #{self_attention_fused.1} parent=0
    #allocation2 [shape = 'u8[4096]{0}', space=vmem, size = 0x1000, scoped, tag = 'input window, operand 0, single buffered']
    #allocation3 [shape = 's32[1]{0}', space=sflag, size = 0x4, scoped, tag = 'scoped memory for self_attention_fused.1']
    #allocation4 [shape = 's32[1]{0}', space=sflag, size = 0x4, scoped, tag = 'scoped memory for self_attention_fused.1']
    #allocation5 [shape = 'u8[8192]{0}', space=vmem, size = 0x2000, scoped, tag = 'input window, operand 1, single buffered']
    #allocation6 [shape = 's32[1]{0}', space=sflag, size = 0x4, scoped, tag = 'scoped memory for self_attention_fused.1']
    #allocation7 [shape = 'u8[4096]{0}', space=vmem, size = 0x1000, scoped, tag = 'output window, operand 0, single buffered']
    %7 = vsyncpa [#allocation3], 0
    %8 = vsyncpa [#allocation6], 0
    %9 = vsyncpa [#allocation4], 0
    // Predicated region
    $region2: #{self_attention_fused.1} parent=1 // pred_check
      _
    $region3: #{self_attention_fused.1} parent=1 // pred_check_branch
      %11 = sbr.rel (0) target = $region5
    $region4: #{self_attention_fused.1} parent=1 // pred_region
      %s13 = ssub.s32 128, 128
      %14 = vsyncadd [#allocation3], %s13
      %s16 = sshll.u32 [#allocation2], 4
      %s17 = int_to_ptr.vmem [resolvable:$true] %s16
      %19 = dma.hbm_to_vmem [thread:$0]  %s0, 128, %s17, [#allocation3]
    $region5: #{self_attention_fused.1} parent=1 // pred_fallthru
      _
    // Predicated region
    $region6: #{self_attention_fused.1} parent=1 // pred_check
      _
    $region7: #{self_attention_fused.1} parent=1 // pred_check_branch
      %21 = sbr.rel (0) target = $region9
    $region8: #{self_attention_fused.1} parent=1 // pred_region
      %s23 = ssub.s32 256, 256
      %24 = vsyncadd [#allocation6], %s23
      %s25 = sshll.u32 [#allocation5], 4
      %s26 = int_to_ptr.vmem [resolvable:$true] %s25
      %31 = dma.hbm_to_vmem [thread:$0]  %s1, 256, %s26, [#allocation6], 64, 64, 4
    $region9: #{self_attention_fused.1} parent=1 // pred_fallthru
      _
    // Predicated region
    $region10: #{self_attention_fused.1} parent=1 // pred_check
      _
    $region11: #{self_attention_fused.1} parent=1 // pred_check_branch
      %33 = sbr.rel (0) target = $region13
    $region12: #{self_attention_fused.1} parent=1 // pred_region
      %34 = dma.done [#allocation3], 128
    $region13: #{self_attention_fused.1} parent=1 // pred_fallthru
      _
    // Predicated region
    $region14: #{self_attention_fused.1} parent=1 // pred_check
      _
    $region15: #{self_attention_fused.1} parent=1 // pred_check_branch
      %36 = sbr.rel (0) target = $region17
    $region16: #{self_attention_fused.1} parent=1 // pred_region
      %37 = dma.done [#allocation6], 256
    $region17: #{self_attention_fused.1} parent=1 // pred_fallthru
      _
    %v39 = vld [vmem:[#allocation2] sm:$0xff]
    %v40 = vpack.c.bf16 %v39, %v39
    %v41 = vld [vmem:[#allocation5] sm:$0xf]
    %v42 = vld [vmem:[#allocation5 + $0x4] sm:$0xf]
    %v43 = vld [vmem:[#allocation5 + $0x8] sm:$0xf]
    %v44 = vld [vmem:[#allocation5 + $0xc] sm:$0xf]
    %v49 = vunpack.c.l.b16 %v41
    %v50 = vunpack.c.l.b16 %v42
    %v51 = vunpack.c.l.b16 %v43
    %v52 = vunpack.c.l.b16 %v44
    %v53 = vpack.c.b16 %v50, %v49
    %v54 = vpack.c.b16 %v52, %v51
    %vm57 = vcmask 261120
    %v59 = vsel %vm57, %v40, 0
    %61 = vmatprep.subr.bf16.mxu0 0
    %62 = vmatpush1.bf16.msra.mxu0 0
    %63 = vmatprep.subr.bf16.mxu0 0
    %64 = vmatpush1.bf16.msra.mxu0 0
    %65 = vmatprep.subr.bf16.mxu0 0
    %66 = vmatpush1.bf16.msra.mxu0 0
    %67 = vmatprep.subr.bf16.mxu0 0
    %68 = vmatpush1.bf16.msra.mxu0 0
    %69 = vmatprep.subr.bf16.mxu0 0
    %70 = vmatpush1.bf16.msra.mxu0 0
    %71 = vmatprep.subr.bf16.mxu0 0
    %72 = vmatpush1.bf16.msra.mxu0 0
    %73 = vmatprep.subr.bf16.mxu0 0
    %74 = vmatpush1.bf16.msra.mxu0 %v54
    %75 = vmatprep.subr.bf16.mxu0 0
    %76 = vmatpush1.bf16.msra.mxu0 %v53
    %77 = vmatprep.subr.bf16.mxu0 0
    %78 = vmatpush2.bf16.msra.mxu0 0
    %79 = vmatprep.subr.bf16.mxu0 0
    %80 = vmatpush2.bf16.msra.mxu0 0
    %81 = vmatprep.subr.bf16.mxu0 0
    %82 = vmatpush2.bf16.msra.mxu0 0
    %83 = vmatprep.subr.bf16.mxu0 0
    %84 = vmatpush2.bf16.msra.mxu0 0
    %85 = vmatprep.subr.bf16.mxu0 0
    %86 = vmatpush2.bf16.msra.mxu0 0
    %87 = vmatprep.subr.bf16.mxu0 0
    %88 = vmatpush2.bf16.msra.mxu0 0
    %89 = vmatprep.subr.bf16.mxu0 0
    %90 = vmatpush2.bf16.msra.mxu0 0
    %91 = vmatprep.subr.bf16.mxu0 0
    %92 = vmatpush2.bf16.msra.mxu0 0
    %93 = vmatprep.mubr.bf16.mxu0 0
    %94 = vmatmul.mubr.bf16.gmra.mxu0 %v59
    %v95 = vpop.f32.mrf.mxu0
    %v96 = vadd.f32 0.0, %v95
    %v97 = vpop.f32.mrf.mxu0
    %v98 = vpop.f32.mrf.mxu0
    %v99 = vpop.f32.mrf.mxu0
    %100 = vdwg.mxu0
    %v101 = vmul.f32 %v96, 0.25
    %103 = vrot.lane.b32.xlu0 %v96, 112
    %v104 = vpop.permute.xlu0 %103
    %vm105 = vcmask 130048
    %v107 = vsel %vm105, %v101, 0
    %v109 = vsel %vm105, %v104, 0
    %111 = vmatprep.subr.mxu0 0.0
    %112 = vmatpush1.xpose.msra.mxu0 0.0
    %113 = vmatprep.subr.mxu0 0.0
    %114 = vmatpush1.xpose.msra.mxu0 0.0
    %115 = vmatprep.subr.mxu0 0.0
    %116 = vmatpush1.xpose.msra.mxu0 0.0
    %117 = vmatprep.subr.mxu0 0.0
    %118 = vmatpush1.xpose.msra.mxu0 0.0
    %119 = vmatprep.subr.mxu0 0.0
    %120 = vmatpush1.xpose.msra.mxu0 0.0
    %121 = vmatprep.subr.mxu0 0.0
    %122 = vmatpush1.xpose.msra.mxu0 0.0
    %123 = vmatprep.subr.mxu0 0.0
    %124 = vmatpush1.xpose.msra.mxu0 0.0
    %125 = vmatprep.subr.mxu0 0.0
    %126 = vmatpush1.xpose.msra.mxu0 0.0
    %127 = vmatprep.subr.mxu0 0.0
    %128 = vmatpush1.xpose.msra.mxu0 0.0
    %129 = vmatprep.subr.mxu0 0.0
    %130 = vmatpush1.xpose.msra.mxu0 0.0
    %131 = vmatprep.subr.mxu0 0.0
    %132 = vmatpush1.xpose.msra.mxu0 0.0
    %133 = vmatprep.subr.mxu0 0.0
    %134 = vmatpush1.xpose.msra.mxu0 0.0
    %135 = vmatprep.subr.mxu0 0.0
    %136 = vmatpush1.xpose.msra.mxu0 0.0
    %137 = vmatprep.subr.mxu0 0.0
    %138 = vmatpush1.xpose.msra.mxu0 0.0
    %139 = vmatprep.subr.mxu0 0.0
    %140 = vmatpush1.xpose.msra.mxu0 0.0
    %141 = vmatprep.subr.mxu0 0.0
    %142 = vmatpush1.xpose.msra.mxu0 %v109
    %143 = vmatprep.subr.mxu0 0.0
    %144 = vmatpush2.xpose.msra.mxu0 0.0
    %145 = vmatprep.subr.mxu0 0.0
    %146 = vmatpush2.xpose.msra.mxu0 0.0
    %147 = vmatprep.subr.mxu0 0.0
    %148 = vmatpush2.xpose.msra.mxu0 0.0
    %149 = vmatprep.subr.mxu0 0.0
    %150 = vmatpush2.xpose.msra.mxu0 0.0
    %151 = vmatprep.subr.mxu0 0.0
    %152 = vmatpush2.xpose.msra.mxu0 0.0
    %153 = vmatprep.subr.mxu0 0.0
    %154 = vmatpush2.xpose.msra.mxu0 0.0
    %155 = vmatprep.subr.mxu0 0.0
    %156 = vmatpush2.xpose.msra.mxu0 0.0
    %157 = vmatprep.subr.mxu0 0.0
    %158 = vmatpush2.xpose.msra.mxu0 0.0
    %159 = vmatprep.subr.mxu0 0.0
    %160 = vmatpush2.xpose.msra.mxu0 0.0
    %161 = vmatprep.subr.mxu0 0.0
    %162 = vmatpush2.xpose.msra.mxu0 0.0
    %163 = vmatprep.subr.mxu0 0.0
    %164 = vmatpush2.xpose.msra.mxu0 0.0
    %165 = vmatprep.subr.mxu0 0.0
    %166 = vmatpush2.xpose.msra.mxu0 0.0
    %167 = vmatprep.subr.mxu0 0.0
    %168 = vmatpush2.xpose.msra.mxu0 0.0
    %169 = vmatprep.subr.mxu0 0.0
    %170 = vmatpush2.xpose.msra.mxu0 0.0
    %171 = vmatprep.subr.mxu0 0.0
    %172 = vmatpush2.xpose.msra.mxu0 0.0
    %173 = vmatprep.subr.mxu0 0.0
    %174 = vmatpush2.xpose.msra.mxu0 0.0
    %175 = vmatprep.mubr.f32.mxu0 0.0
    %176 = vmatmul.mubr.f32.gmra.mxu0 %v107
    %v177 = vpop.f32.mrf.mxu0
    %v178 = vadd.f32 0.0, %v177
    %v179 = vpop.f32.mrf.mxu0
    %180 = vdwg.mxu0
    %vm181 = vcmask 64512
    %v182 = vsel %vm181, %v178, -inf
    %183 = vmax.xlane.f32.xlu0 %v182
    %v184 = vpop.xlane.xlu0 %183
    %v185 = vsub.f32 %v178, %v184
    %v186 = vmul.f32 %v185, 1.442695
    %v187 = vpow.pop %v186
    %v188 = vsel %vm181, %v187, 0.0
    %189 = vadd.xlane.f32.xlu0 %v188
    %v190 = vpop.xlane.xlu0 %189
    %v191 = vrcp.pop %v190
    %v192 = vmul.f32 %v187, %v191
    %193 = vrot.lane.b32.xlu0 %v96, 96
    %v194 = vpop.permute.xlu0 %193
    %v197 = vsel %vm181, %v192, 0
    %199 = vmatprep.subr.mxu0 0.0
    %200 = vmatpush1.msra.mxu0 0.0
    %201 = vmatprep.subr.mxu0 0.0
    %202 = vmatpush1.msra.mxu0 0.0
    %203 = vmatprep.subr.mxu0 0.0
    %204 = vmatpush1.msra.mxu0 0.0
    %205 = vmatprep.subr.mxu0 0.0
    %206 = vmatpush1.msra.mxu0 0.0
    %207 = vmatprep.subr.mxu0 0.0
    %208 = vmatpush1.msra.mxu0 0.0
    %209 = vmatprep.subr.mxu0 0.0
    %210 = vmatpush1.msra.mxu0 0.0
    %211 = vmatprep.subr.mxu0 0.0
    %212 = vmatpush1.msra.mxu0 0.0
    %213 = vmatprep.subr.mxu0 0.0
    %214 = vmatpush1.msra.mxu0 0.0
    %215 = vmatprep.subr.mxu0 0.0
    %216 = vmatpush1.msra.mxu0 0.0
    %217 = vmatprep.subr.mxu0 0.0
    %218 = vmatpush1.msra.mxu0 0.0
    %219 = vmatprep.subr.mxu0 0.0
    %220 = vmatpush1.msra.mxu0 0.0
    %221 = vmatprep.subr.mxu0 0.0
    %222 = vmatpush1.msra.mxu0 0.0
    %223 = vmatprep.subr.mxu0 0.0
    %224 = vmatpush1.msra.mxu0 0.0
    %225 = vmatprep.subr.mxu0 0.0
    %226 = vmatpush1.msra.mxu0 0.0
    %227 = vmatprep.subr.mxu0 0.0
    %228 = vmatpush1.msra.mxu0 0.0
    %229 = vmatprep.subr.mxu0 0.0
    %230 = vmatpush1.msra.mxu0 %v194
    %231 = vmatprep.subr.mxu0 0.0
    %232 = vmatpush2.msra.mxu0 0.0
    %233 = vmatprep.subr.mxu0 0.0
    %234 = vmatpush2.msra.mxu0 0.0
    %235 = vmatprep.subr.mxu0 0.0
    %236 = vmatpush2.msra.mxu0 0.0
    %237 = vmatprep.subr.mxu0 0.0
    %238 = vmatpush2.msra.mxu0 0.0
    %239 = vmatprep.subr.mxu0 0.0
    %240 = vmatpush2.msra.mxu0 0.0
    %241 = vmatprep.subr.mxu0 0.0
    %242 = vmatpush2.msra.mxu0 0.0
    %243 = vmatprep.subr.mxu0 0.0
    %244 = vmatpush2.msra.mxu0 0.0
    %245 = vmatprep.subr.mxu0 0.0
    %246 = vmatpush2.msra.mxu0 0.0
    %247 = vmatprep.subr.mxu0 0.0
    %248 = vmatpush2.msra.mxu0 0.0
    %249 = vmatprep.subr.mxu0 0.0
    %250 = vmatpush2.msra.mxu0 0.0
    %251 = vmatprep.subr.mxu0 0.0
    %252 = vmatpush2.msra.mxu0 0.0
    %253 = vmatprep.subr.mxu0 0.0
    %254 = vmatpush2.msra.mxu0 0.0
    %255 = vmatprep.subr.mxu0 0.0
    %256 = vmatpush2.msra.mxu0 0.0
    %257 = vmatprep.subr.mxu0 0.0
    %258 = vmatpush2.msra.mxu0 0.0
    %259 = vmatprep.subr.mxu0 0.0
    %260 = vmatpush2.msra.mxu0 0.0
    %261 = vmatprep.subr.mxu0 0.0
    %262 = vmatpush2.msra.mxu0 0.0
    %263 = vmatprep.mubr.f32.mxu0 0.0
    %264 = vmatmul.mubr.f32.gmra.mxu0 %v197
    %v265 = vpop.f32.mrf.mxu0
    %v266 = vadd.f32 0.0, %v265
    %v267 = vpop.f32.mrf.mxu0
    %268 = vdwg.mxu0
    %269 = vst.msk [vmem:[#allocation7] sm:$0xff] %vm105, %v266
    // Predicated region
    $region18: #{self_attention_fused.1} parent=1 // pred_check
      _
    $region19: #{self_attention_fused.1} parent=1 // pred_check_branch
      %271 = sbr.rel (0) target = $region21
    $region20: #{self_attention_fused.1} parent=1 // pred_region
      %s273 = ssub.s32 128, 128
      %274 = vsyncadd [#allocation4], %s273
      %s276 = sshll.u32 [#allocation7], 4
      %s277 = int_to_ptr.vmem [resolvable:$true] %s276
      %279 = dma.vmem_to_hbm [thread:$0]  %s277, 128, %s2, [#allocation4]
    $region21: #{self_attention_fused.1} parent=1 // pred_fallthru
      _
    // Predicated region
    $region22: #{self_attention_fused.1} parent=1 // pred_check
      _
    $region23: #{self_attention_fused.1} parent=1 // pred_check_branch
      %281 = sbr.rel (0) target = $region25
    $region24: #{self_attention_fused.1} parent=1 // pred_region
      %282 = dma.done [#allocation4], 128
    $region25: #{self_attention_fused.1} parent=1 // pred_fallthru
      _
    %283 = vsyncpa [#allocation3], 1
    %284 = vsyncpa [#allocation6], 1
    %285 = vsyncpa [#allocation4], 1

</llo_original>
